<compile_context>
chip_gen: v6e
topology: v6e:2x2x1
jax: 0.10.0
libtpu: 0.0.40
codegen_flags: <defaults>
</compile_context>

<pallas_src>
import functools

import jax
import jax.numpy as jnp
import numpy as np
from jax import lax
from jax.experimental import pallas as pl
from jax.experimental.pallas import tpu as pltpu


def _gelu(x):
    # tanh-approximate GELU (maps onto the EUP cleanly)
    return jax.nn.gelu(x, approximate=True)


def _round_up(a, m):
    return (a + m - 1) // m * m


def _vmem_capacity_bytes():
    try:
        return int(pltpu.get_tpu_info().vmem_capacity_bytes)
    except Exception:
        return 128 * 1024 * 1024


def _pick_tq(n_ctx, batch, vmem_cap_bytes):
    """Tile size over output rows (n_audio_ctx), chosen per TPU generation."""
    full = _round_up(n_ctx, 8)
    if vmem_cap_bytes <= 64 * 1024 * 1024:
        # v7x: 64 MiB/TC, 2 TCs share the grid -> prefer tile counts that split evenly
        # across cores while minimizing padded work.
        best = None
        for cand in (512, 448, 384, 320, 256):
            if cand > full:
                continue
            nt = pl.cdiv(n_ctx, cand)
            if (batch * nt) % 2:
                continue
            work = nt * cand
            if best is None or work < best[0]:
                best = (work, cand)
        if best is not None:
            return best[1]
        return min(384, full)
    # v5e / v6e (128 MiB VMEM): big tiles to amortize the ~0.35 us per-grid-step overhead.
    return min(512, full)


@functools.lru_cache(maxsize=None)
def _single_buffer_supported():
    """Probe (one tiny compile) whether pipeline_mode=pl.Buffered(1) is accepted."""
    if not hasattr(pl, "Buffered"):
        return False
    try:
        w_spec = pl.BlockSpec((8, 128), lambda i: (0, 0), pipeline_mode=pl.Buffered(1))

        def _k(w_ref, o_ref):
            o_ref[...] = w_ref[...] + 1.0

        f = pl.pallas_call(
            _k,
            out_shape=jax.ShapeDtypeStruct((8, 128), jnp.float32),
            grid=(2,),
            in_specs=[w_spec],
            out_specs=pl.BlockSpec((8, 128), lambda i: (0, 0)),
        )
        jax.jit(f).lower(jax.ShapeDtypeStruct((8, 128), jnp.float32)).compile()
        return True
    except Exception:
        return False


def audio_encoder_stem_kernel(a_ref, bm_ref, bh_ref, w1_ref, w2_ref,
                              b1_ref, b2_ref, pos_ref, o_ref, h_ref):
    # a_ref  : (TQ, 3*C_in) bf16  A[j]  = [x[2j-1], x[2j],   x[2j+1]] -> h1[2j]    (even)
    # bm_ref : (TQ, 3*C_in) bf16  Bm[j] = [x[2j-2], x[2j-1], x[2j]]   -> h1[2j-1]  (odd)
    # bh_ref : (1,  3*C_in) bf16  halo row Bm[t0+TQ]                  -> h1[2(t0+TQ)-1]
    # w1_ref : (3*C_in, D)  bf16  conv1 taps [w1[0]; w1[1]; w1[2]]
    # w2_ref : (3*D, D)     bf16  conv2 taps [w2[1]; w2[0]; w2[2]]  (matches h layout)
    # b1/b2  : (1, D) f32;  pos_ref: (TQ, D) bf16;  o_ref: (TQ, D)
    # h_ref  : (TQ, 3*D) bf16 scratch, row i = [ even_i | odd_prev_i | odd_next_i ]
    TQ, D = o_ref.shape

    # conv1 + GELU, even output rows  h1[2(t0+i)]   (single unit-stride K=3*C_in matmul)
    e = jnp.dot(a_ref[...], w1_ref[...], preferred_element_type=jnp.float32)
    h_ref[:, 0:D] = _gelu(e + b1_ref[...]).astype(h_ref.dtype)

    # conv1 + GELU, odd rows  h1[2(t0+i)-1]  plus the one-row halo  h1[2(t0+TQ)-1]
    p = _gelu(jnp.dot(bm_ref[...], w1_ref[...], preferred_element_type=jnp.float32)
              + b1_ref[...])
    ph = _gelu(jnp.dot(bh_ref[...], w1_ref[...], preferred_element_type=jnp.float32)
               + b1_ref[...])
    h_ref[:, D:2 * D] = p.astype(h_ref.dtype)                     # odd_prev = h1[2j-1]
    # odd_next = h1[2j+1]: rows shifted by one (register-value shift; XLU has slack),
    # last row comes from the halo.  Final store is full-width and sublane-aligned.
    h_ref[:, 2 * D:3 * D] = jnp.concatenate([p[1:, :], ph], axis=0).astype(h_ref.dtype)

    # conv2's left zero pad: h1[-1] must be 0 (first row of the very first tile only)
    @pl.when(pl.program_id(1) == 0)
    def _():
        h_ref[0:1, D:2 * D] = jnp.zeros((1, D), h_ref.dtype)

    # conv2 (k=3, stride 2, pad 1) + GELU + positional embedding, one K=3*D matmul:
    #   out[j] = h1[2j-1]@w2[0] + h1[2j]@w2[1] + h1[2j+1]@w2[2] + b2
    a2 = jnp.dot(h_ref[...], w2_ref[...], preferred_element_type=jnp.float32)
    o_ref[...] = (_gelu(a2 + b2_ref[...])
                  + pos_ref[...].astype(jnp.float32)).astype(o_ref.dtype)


def audio_encoder_trt_forward(x_ncw, params, *, tq=None):
    """x_ncw: (B, n_mels, T) mel input (NCW, like the PyTorch module).
    Returns (B, T//2, d_model): conv stem output + positional_embedding[-(T//2):]."""
    w1, b1, w2, b2, pos = params
    B, C_in, T = x_ncw.shape
    assert T % 2 == 0
    n_ctx = T // 2                                   # n_audio_ctx = x.shape[2] // 2
    D = w1.shape[-1]

    vmem_cap = _vmem_capacity_bytes()
    if tq is None:
        tq = _pick_tq(n_ctx, B, vmem_cap)
    assert tq % 8 == 0
    n_ctx_pad = _round_up(n_ctx, tq)
    n_tiles = n_ctx_pad // tq
    cdt = jnp.bfloat16

    # ---- one-time XLA prep: NCW -> NTC, time zero-pad, even/odd 3-tap packing.
    x_t = jnp.transpose(x_ncw, (0, 2, 1)).astype(cdt)                 # (B, T, C_in)
    pad_r = 2 + 2 * (n_ctx_pad - n_ctx)
    xp = jnp.pad(x_t, ((0, 0), (2, pad_r), (0, 0)))                   # (B, 2*n_ctx_pad+4, C)
    Tp = 2 * n_ctx_pad

    # A[j]  = [x[2j-1], x[2j], x[2j+1]]  (even conv1 rows);   note x[i] == xp[i+2]
    A = jnp.concatenate([xp[:, 1:1 + Tp:2], xp[:, 2:2 + Tp:2], xp[:, 3:3 + Tp:2]],
                        axis=-1)                                      # (B, n_ctx_pad, 3C)
    # Bm[j] = [x[2j-2], x[2j-1], x[2j]]  (odd conv1 rows)
    Bm = jnp.concatenate([xp[:, 0:Tp:2], xp[:, 1:1 + Tp:2], xp[:, 2:2 + Tp:2]],
                         axis=-1)                                     # (B, n_ctx_pad, 3C)
    # per-tile 1-row halo  Bm[(t+1)*tq]  (tiny; replaces the old full Bm_win copy)
    s = 2 * tq
    Bh = jnp.concatenate([xp[:, s:s * n_tiles + 1:s],
                          xp[:, s + 1:s * n_tiles + 2:s],
                          xp[:, s + 2:s * n_tiles + 3:s]], axis=-1)   # (B, n_tiles, 3C)
    Bh = Bh.reshape(B, n_tiles, 1, 3 * C_in)

    w1c = jnp.concatenate([w1[0], w1[1], w1[2]], axis=0).astype(cdt)  # (3C, D)
    w2c = jnp.concatenate([w2[1], w2[0], w2[2]], axis=0).astype(cdt)  # (3D, D) even|prev|next
    b1_2d = b1.reshape(1, D).astype(jnp.float32)
    b2_2d = b2.reshape(1, D).astype(jnp.float32)
    pos_pad = jnp.pad(pos[-n_ctx:, :],
                      ((0, n_ctx_pad - n_ctx), (0, 0))).astype(cdt)   # bf16 pos stream

    single = _single_buffer_supported()

    def _resident(shape):
        idx = lambda b, t: (0,) * len(shape)
        if single:
            return pl.BlockSpec(shape, idx, pipeline_mode=pl.Buffered(1))
        return pl.BlockSpec(shape, idx)

    out_dtype = x_ncw.dtype            # keep the module's I/O dtype (bf16 if caller feeds bf16)
    bpe_out = jnp.dtype(out_dtype).itemsize
    wbuf = 1 if single else 2
    est = (wbuf * 2 * (w1c.size + w2c.size)            # resident bf16 weights
           + wbuf * 4 * (b1_2d.size + b2_2d.size)      # resident f32 biases
           + 2 * 2 * (2 * tq + 1) * 3 * C_in           # A + Bm + halo tiles (bf16, 2 bufs)
           + 2 * 2 * tq * D                            # pos tiles (bf16, 2 bufs)
           + 2 * bpe_out * tq * D                      # output tiles (2 bufs)
           + 2 * tq * 3 * D                            # h scratch (bf16)
           + 4 * 4 * tq * D)                           # f32 value temps (e / p / a2) headroom
    vmem_limit = int(min(max(2 * est, 32 * 1024 * 1024), int(0.85 * vmem_cap)))

    out = pl.pallas_call(
        audio_encoder_stem_kernel,
        out_shape=jax.ShapeDtypeStruct((B, n_ctx_pad, D), out_dtype),
        grid_spec=pltpu.PrefetchScalarGridSpec(
            num_scalar_prefetch=0,
            grid=(B, n_tiles),
            in_specs=[
                pl.BlockSpec((None, tq, 3 * C_in), lambda b, t: (b, t, 0)),          # A
                pl.BlockSpec((None, tq, 3 * C_in), lambda b, t: (b, t, 0)),          # Bm
                pl.BlockSpec((None, None, 1, 3 * C_in), lambda b, t: (b, t, 0, 0)),  # halo
                _resident((3 * C_in, D)),                                            # w1
                _resident((3 * D, D)),                                               # w2
                _resident((1, D)),                                                   # b1
                _resident((1, D)),                                                   # b2
                pl.BlockSpec((tq, D), lambda b, t: (t, 0)),                          # pos
            ],
            out_specs=pl.BlockSpec((None, tq, D), lambda b, t: (b, t, 0)),
            scratch_shapes=[pltpu.VMEM((tq, 3 * D), cdt)],
        ),
        compiler_params=pltpu.CompilerParams(
            dimension_semantics=("parallel", "parallel"),
            vmem_limit_bytes=vmem_limit,
        ),
    )(A, Bm, Bh, w1c, w2c, b1_2d, b2_2d, pos_pad)

    return out[:, :n_ctx, :]


def init_params(key, n_mels, d_model, max_ctx):
    k1, k2, k3, k4, k5 = jax.random.split(key, 5)
    s1 = 1.0 / np.sqrt(3 * n_mels)
    s2 = 1.0 / np.sqrt(3 * d_model)
    w1 = jax.random.normal(k1, (3, n_mels, d_model), jnp.float32) * s1
    b1 = jax.random.normal(k2, (d_model,), jnp.float32) * 0.02
    w2 = jax.random.normal(k3, (3, d_model, d_model), jnp.float32) * s2
    b2 = jax.random.normal(k4, (d_model,), jnp.float32) * 0.02
    pos = jax.random.normal(k5, (max_ctx, d_model), jnp.float32) * 0.02
    return w1, b1, w2, b2, pos


def reference_forward(x_ncw, params):
    """Pure-JAX reference with PyTorch Conv1d semantics.  Inputs, weights, pos and the
    inter-conv activation are rounded to bf16 to mirror the kernel's bf16 MXU operands /
    bf16 conv1-activation scratch (accumulation stays f32)."""
    w1, b1, w2, b2, pos = params
    q = lambda a: a.astype(jnp.bfloat16).astype(jnp.float32)
    xq, w1q, w2q = q(x_ncw), q(w1), q(w2)
    T = x_ncw.shape[2]
    n_ctx = T // 2
    w1_oik = jnp.transpose(w1q, (2, 1, 0))           # (C_out, C_in, K)
    w2_oik = jnp.transpose(w2q, (2, 1, 0))
    h = lax.conv_general_dilated(xq, w1_oik, window_strides=(1,), padding=((1, 1),),
                                 dimension_numbers=("NCH", "OIH", "NCH"))
    h = q(_gelu(h + b1[None, :, None]))              # kernel keeps conv1 act in bf16
    h = lax.conv_general_dilated(h, w2_oik, window_strides=(2,), padding=((1, 1),),
                                 dimension_numbers=("NCH", "OIH", "NCH"))
    h = _gelu(h + b2[None, :, None])
    h = jnp.transpose(h, (0, 2, 1))                  # (B, n_ctx, D)
    return h + q(pos[-n_ctx:, :])[None]


if __name__ == "__main__":
    # small shapes; tq=8 forces 3 time tiles (incl. a padded last tile) to exercise
    # tiling, the 1-row odd halo, and the left/right zero-padding paths.
    B, n_mels, T, d_model, max_ctx = 2, 16, 44, 128, 32
    key = jax.random.PRNGKey(0)
    kx, kp = jax.random.split(key)
    params = init_params(kp, n_mels, d_model, max_ctx)
    x = jax.random.normal(kx, (B, n_mels, T), jnp.float32)   # NCW mel input, like PyTorch

    fwd = jax.jit(functools.partial(audio_encoder_trt_forward, tq=8))
    out = jax.block_until_ready(fwd(x, params))
    ref = jax.block_until_ready(reference_forward(x, params))
    assert out.shape == (B, T // 2, d_model)
    np.testing.assert_allclose(np.asarray(out, dtype=np.float32),
                               np.asarray(ref, dtype=np.float32), rtol=2e-2, atol=2e-2)
    print("KERNEL_OK")
</pallas_src>

<mosaic_0001>
module attributes {stable_mosaic.version = 11 : i64} {
  func.func @audio_encoder_stem_kernel(%arg0: i32, %arg1: i32, %arg2: memref<1x8x48xbf16, #tpu.memory_space<vmem>>, %arg3: memref<1x8x48xbf16, #tpu.memory_space<vmem>>, %arg4: memref<1x1x1x48xbf16, #tpu.memory_space<vmem>>, %arg5: memref<48x128xbf16, #tpu.memory_space<vmem>>, %arg6: memref<384x128xbf16, #tpu.memory_space<vmem>>, %arg7: memref<1x128xf32, #tpu.memory_space<vmem>>, %arg8: memref<1x128xf32, #tpu.memory_space<vmem>>, %arg9: memref<8x128xbf16, #tpu.memory_space<vmem>>, %arg10: memref<1x8x128xf32, #tpu.memory_space<vmem>>, %arg11: memref<8x384xbf16, #tpu.memory_space<vmem>>) attributes {dimension_semantics = [#tpu.dimension_semantics<parallel>, #tpu.dimension_semantics<parallel>], iteration_bounds = array<i64: 2, 3>, scalar_prefetch = 0 : i64, scratch_operands = 1 : i64, tpu.core_type = #tpu.core_type<tc>, window_params = [{transform_indices = @transform_0, window_bounds = array<i64: 1, 8, 48>}, {transform_indices = @transform_1, window_bounds = array<i64: 1, 8, 48>}, {transform_indices = @transform_2, window_bounds = array<i64: 1, 1, 1, 48>}, {pipeline_mode = #tpu.pipeline_mode<synchronous>, transform_indices = @transform_3, window_bounds = array<i64: 48, 128>}, {pipeline_mode = #tpu.pipeline_mode<synchronous>, transform_indices = @transform_4, window_bounds = array<i64: 384, 128>}, {pipeline_mode = #tpu.pipeline_mode<synchronous>, transform_indices = @transform_5, window_bounds = array<i64: 1, 128>}, {pipeline_mode = #tpu.pipeline_mode<synchronous>, transform_indices = @transform_6, window_bounds = array<i64: 1, 128>}, {transform_indices = @transform_7, window_bounds = array<i64: 8, 128>}, {transform_indices = @transform_8, window_bounds = array<i64: 1, 8, 128>}]} {
    %c0 = arith.constant 0 : index
    %c0_0 = arith.constant 0 : index
    %c0_1 = arith.constant 0 : index
    %0 = vector.load %arg2[%c0, %c0_0, %c0_1] : memref<1x8x48xbf16, #tpu.memory_space<vmem>>, vector<1x8x48xbf16>
    %1 = vector.shape_cast %0 : vector<1x8x48xbf16> to vector<8x48xbf16>
    %c0_2 = arith.constant 0 : index
    %c0_3 = arith.constant 0 : index
    %2 = vector.load %arg5[%c0_2, %c0_3] : memref<48x128xbf16, #tpu.memory_space<vmem>>, vector<48x128xbf16>
    %cst = arith.constant dense<0.000000e+00> : vector<8x128xf32>
    %3 = tpu.matmul %1, %2, %cst {dimension_numbers = #tpu.dot_dimension_numbers<[1], [0], [0], [1], [0, 0, 1, 1], [], []>} : vector<8x48xbf16>, vector<48x128xbf16>, vector<8x128xf32> -> vector<8x128xf32>
    %c0_4 = arith.constant 0 : index
    %c0_5 = arith.constant 0 : index
    %4 = vector.load %arg7[%c0_4, %c0_5] : memref<1x128xf32, #tpu.memory_space<vmem>>, vector<1x128xf32>
    %5 = vector.broadcast %4 : vector<1x128xf32> to vector<8x128xf32>
    %6 = arith.addf %3, %5 : vector<8x128xf32>
    %7 = arith.mulf %6, %6 : vector<8x128xf32>
    %8 = arith.mulf %6, %7 : vector<8x128xf32>
    %cst_6 = arith.constant 4.471500e-02 : f32
    %9 = vector.broadcast %cst_6 : f32 to vector<8x128xf32>
    %10 = arith.mulf %9, %8 : vector<8x128xf32>
    %11 = arith.addf %6, %10 : vector<8x128xf32>
    %cst_7 = arith.constant 0.797884583 : f32
    %12 = vector.broadcast %cst_7 : f32 to vector<8x128xf32>
    %13 = arith.mulf %12, %11 : vector<8x128xf32>
    %14 = math.tanh %13 : vector<8x128xf32>
    %cst_8 = arith.constant 1.000000e+00 : f32
    %15 = vector.broadcast %cst_8 : f32 to vector<8x128xf32>
    %16 = arith.addf %15, %14 : vector<8x128xf32>
    %cst_9 = arith.constant 5.000000e-01 : f32
    %17 = vector.broadcast %cst_9 : f32 to vector<8x128xf32>
    %18 = arith.mulf %17, %16 : vector<8x128xf32>
    %19 = arith.mulf %6, %18 : vector<8x128xf32>
    %20 = arith.truncf %19 : vector<8x128xf32> to vector<8x128xbf16>
    %c0_10 = arith.constant 0 : index
    %c0_11 = arith.constant 0 : index
    %21 = vector.load %arg11[%c0_10, %c0_11] : memref<8x384xbf16, #tpu.memory_space<vmem>>, vector<8x128xbf16>
    tpu.vector_store %arg11[%c0_10, %c0_11], %20 {strides = array<i32>} : memref<8x384xbf16, #tpu.memory_space<vmem>>, vector<8x128xbf16>,
    %c0_12 = arith.constant 0 : index
    %c0_13 = arith.constant 0 : index
    %c0_14 = arith.constant 0 : index
    %22 = vector.load %arg3[%c0_12, %c0_13, %c0_14] : memref<1x8x48xbf16, #tpu.memory_space<vmem>>, vector<1x8x48xbf16>
    %23 = vector.shape_cast %22 : vector<1x8x48xbf16> to vector<8x48xbf16>
    %c0_15 = arith.constant 0 : index
    %c0_16 = arith.constant 0 : index
    %24 = vector.load %arg5[%c0_15, %c0_16] : memref<48x128xbf16, #tpu.memory_space<vmem>>, vector<48x128xbf16>
    %cst_17 = arith.constant dense<0.000000e+00> : vector<8x128xf32>
    %25 = tpu.matmul %23, %24, %cst_17 {dimension_numbers = #tpu.dot_dimension_numbers<[1], [0], [0], [1], [0, 0, 1, 1], [], []>} : vector<8x48xbf16>, vector<48x128xbf16>, vector<8x128xf32> -> vector<8x128xf32>
    %c0_18 = arith.constant 0 : index
    %c0_19 = arith.constant 0 : index
    %26 = vector.load %arg7[%c0_18, %c0_19] : memref<1x128xf32, #tpu.memory_space<vmem>>, vector<1x128xf32>
    %27 = vector.broadcast %26 : vector<1x128xf32> to vector<8x128xf32>
    %28 = arith.addf %25, %27 : vector<8x128xf32>
    %29 = arith.mulf %28, %28 : vector<8x128xf32>
    %30 = arith.mulf %28, %29 : vector<8x128xf32>
    %cst_20 = arith.constant 4.471500e-02 : f32
    %31 = vector.broadcast %cst_20 : f32 to vector<8x128xf32>
    %32 = arith.mulf %31, %30 : vector<8x128xf32>
    %33 = arith.addf %28, %32 : vector<8x128xf32>
    %cst_21 = arith.constant 0.797884583 : f32
    %34 = vector.broadcast %cst_21 : f32 to vector<8x128xf32>
    %35 = arith.mulf %34, %33 : vector<8x128xf32>
    %36 = math.tanh %35 : vector<8x128xf32>
    %cst_22 = arith.constant 1.000000e+00 : f32
    %37 = vector.broadcast %cst_22 : f32 to vector<8x128xf32>
    %38 = arith.addf %37, %36 : vector<8x128xf32>
    %cst_23 = arith.constant 5.000000e-01 : f32
    %39 = vector.broadcast %cst_23 : f32 to vector<8x128xf32>
    %40 = arith.mulf %39, %38 : vector<8x128xf32>
    %41 = arith.mulf %28, %40 : vector<8x128xf32>
    %c0_24 = arith.constant 0 : index
    %c0_25 = arith.constant 0 : index
    %c0_26 = arith.constant 0 : index
    %c0_27 = arith.constant 0 : index
    %42 = vector.load %arg4[%c0_24, %c0_25, %c0_26, %c0_27] : memref<1x1x1x48xbf16, #tpu.memory_space<vmem>>, vector<1x1x1x48xbf16>
    %43 = vector.shape_cast %42 : vector<1x1x1x48xbf16> to vector<1x48xbf16>
    %c0_28 = arith.constant 0 : index
    %c0_29 = arith.constant 0 : index
    %44 = vector.load %arg5[%c0_28, %c0_29] : memref<48x128xbf16, #tpu.memory_space<vmem>>, vector<48x128xbf16>
    %cst_30 = arith.constant dense<0.000000e+00> : vector<1x128xf32>
    %45 = tpu.matmul %43, %44, %cst_30 {dimension_numbers = #tpu.dot_dimension_numbers<[1], [0], [0], [1], [0, 0, 1, 1], [], []>} : vector<1x48xbf16>, vector<48x128xbf16>, vector<1x128xf32> -> vector<1x128xf32>
    %c0_31 = arith.constant 0 : index
    %c0_32 = arith.constant 0 : index
    %46 = vector.load %arg7[%c0_31, %c0_32] : memref<1x128xf32, #tpu.memory_space<vmem>>, vector<1x128xf32>
    %47 = arith.addf %45, %46 : vector<1x128xf32>
    %48 = arith.mulf %47, %47 : vector<1x128xf32>
    %49 = arith.mulf %47, %48 : vector<1x128xf32>
    %cst_33 = arith.constant 4.471500e-02 : f32
    %50 = vector.broadcast %cst_33 : f32 to vector<1x128xf32>
    %51 = arith.mulf %50, %49 : vector<1x128xf32>
    %52 = arith.addf %47, %51 : vector<1x128xf32>
    %cst_34 = arith.constant 0.797884583 : f32
    %53 = vector.broadcast %cst_34 : f32 to vector<1x128xf32>
    %54 = arith.mulf %53, %52 : vector<1x128xf32>
    %55 = math.tanh %54 : vector<1x128xf32>
    %cst_35 = arith.constant 1.000000e+00 : f32
    %56 = vector.broadcast %cst_35 : f32 to vector<1x128xf32>
    %57 = arith.addf %56, %55 : vector<1x128xf32>
    %cst_36 = arith.constant 5.000000e-01 : f32
    %58 = vector.broadcast %cst_36 : f32 to vector<1x128xf32>
    %59 = arith.mulf %58, %57 : vector<1x128xf32>
    %60 = arith.mulf %47, %59 : vector<1x128xf32>
    %61 = arith.truncf %41 : vector<8x128xf32> to vector<8x128xbf16>
    %c0_37 = arith.constant 0 : index
    %c128 = arith.constant 128 : index
    %62 = vector.load %arg11[%c0_37, %c128] : memref<8x384xbf16, #tpu.memory_space<vmem>>, vector<8x128xbf16>
    tpu.vector_store %arg11[%c0_37, %c128], %61 {strides = array<i32>} : memref<8x384xbf16, #tpu.memory_space<vmem>>, vector<8x128xbf16>,
    %63 = vector.extract_strided_slice %41 {offsets = [1, 0], sizes = [7, 128], strides = [1, 1]} : vector<8x128xf32> to vector<7x128xf32>
    %64 = tpu.concatenate %63, %60 in 0 : vector<7x128xf32>, vector<1x128xf32> -> vector<8x128xf32>
    %65 = arith.truncf %64 : vector<8x128xf32> to vector<8x128xbf16>
    %c0_38 = arith.constant 0 : index
    %c256 = arith.constant 256 : index
    %66 = vector.load %arg11[%c0_38, %c256] : memref<8x384xbf16, #tpu.memory_space<vmem>>, vector<8x128xbf16>
    tpu.vector_store %arg11[%c0_38, %c256], %65 {strides = array<i32>} : memref<8x384xbf16, #tpu.memory_space<vmem>>, vector<8x128xbf16>,
    %c0_i32 = arith.constant 0 : i32
    %67 = arith.cmpi eq, %arg1, %c0_i32 : i32
    %68 = arith.extui %67 : i1 to i32
    %c0_i32_39 = arith.constant 0 : i32
    %69 = arith.cmpi ne, %68, %c0_i32_39 : i32
    scf.if %69 {
      %cst_56 = arith.constant 0.000000e+00 : bf16
      %95 = vector.broadcast %cst_56 : bf16 to vector<1x128xbf16>
      %c0_57 = arith.constant 0 : index
      %c128_58 = arith.constant 128 : index
      %96 = vector.load %arg11[%c0_57, %c128_58] : memref<8x384xbf16, #tpu.memory_space<vmem>>, vector<1x128xbf16>
      tpu.vector_store %arg11[%c0_57, %c128_58], %95 {strides = array<i32>} : memref<8x384xbf16, #tpu.memory_space<vmem>>, vector<1x128xbf16>,
    } else {
    }
    %c0_40 = arith.constant 0 : index
    %c0_41 = arith.constant 0 : index
    %70 = vector.load %arg11[%c0_40, %c0_41] : memref<8x384xbf16, #tpu.memory_space<vmem>>, vector<8x384xbf16>
    %c0_42 = arith.constant 0 : index
    %c0_43 = arith.constant 0 : index
    %71 = vector.load %arg6[%c0_42, %c0_43] : memref<384x128xbf16, #tpu.memory_space<vmem>>, vector<384x128xbf16>
    %cst_44 = arith.constant dense<0.000000e+00> : vector<8x128xf32>
    %72 = tpu.matmul %70, %71, %cst_44 {dimension_numbers = #tpu.dot_dimension_numbers<[1], [0], [0], [1], [0, 0, 1, 1], [], []>} : vector<8x384xbf16>, vector<384x128xbf16>, vector<8x128xf32> -> vector<8x128xf32>
    %c0_45 = arith.constant 0 : index
    %c0_46 = arith.constant 0 : index
    %73 = vector.load %arg8[%c0_45, %c0_46] : memref<1x128xf32, #tpu.memory_space<vmem>>, vector<1x128xf32>
    %74 = vector.broadcast %73 : vector<1x128xf32> to vector<8x128xf32>
    %75 = arith.addf %72, %74 : vector<8x128xf32>
    %76 = arith.mulf %75, %75 : vector<8x128xf32>
    %77 = arith.mulf %75, %76 : vector<8x128xf32>
    %cst_47 = arith.constant 4.471500e-02 : f32
    %78 = vector.broadcast %cst_47 : f32 to vector<8x128xf32>
    %79 = arith.mulf %78, %77 : vector<8x128xf32>
    %80 = arith.addf %75, %79 : vector<8x128xf32>
    %cst_48 = arith.constant 0.797884583 : f32
    %81 = vector.broadcast %cst_48 : f32 to vector<8x128xf32>
    %82 = arith.mulf %81, %80 : vector<8x128xf32>
    %83 = math.tanh %82 : vector<8x128xf32>
    %cst_49 = arith.constant 1.000000e+00 : f32
    %84 = vector.broadcast %cst_49 : f32 to vector<8x128xf32>
    %85 = arith.addf %84, %83 : vector<8x128xf32>
    %cst_50 = arith.constant 5.000000e-01 : f32
    %86 = vector.broadcast %cst_50 : f32 to vector<8x128xf32>
    %87 = arith.mulf %86, %85 : vector<8x128xf32>
    %88 = arith.mulf %75, %87 : vector<8x128xf32>
    %c0_51 = arith.constant 0 : index
    %c0_52 = arith.constant 0 : index
    %89 = vector.load %arg9[%c0_51, %c0_52] : memref<8x128xbf16, #tpu.memory_space<vmem>>, vector<8x128xbf16>
    %90 = arith.extf %89 : vector<8x128xbf16> to vector<8x128xf32>
    %91 = arith.addf %88, %90 : vector<8x128xf32>
    %c0_53 = arith.constant 0 : index
    %c0_54 = arith.constant 0 : index
    %c0_55 = arith.constant 0 : index
    %92 = vector.load %arg10[%c0_53, %c0_54, %c0_55] : memref<1x8x128xf32, #tpu.memory_space<vmem>>, vector<1x8x128xf32>
    %93 = vector.shape_cast %92 : vector<1x8x128xf32> to vector<8x128xf32>
    %94 = vector.shape_cast %91 : vector<8x128xf32> to vector<1x8x128xf32>
    tpu.vector_store %arg10[%c0_53, %c0_54, %c0_55], %94 {strides = array<i32>} : memref<1x8x128xf32, #tpu.memory_space<vmem>>, vector<1x8x128xf32>,
    return
  }
  func.func @transform_0(%arg0: i32, %arg1: i32) -> (i32, i32, i32) {
    %c0_i32 = arith.constant 0 : i32
    %c0_i32_0 = arith.constant 0 : i32
    return %arg0, %arg1, %c0_i32 : i32, i32, i32
  }
  func.func @transform_1(%arg0: i32, %arg1: i32) -> (i32, i32, i32) {
    %c0_i32 = arith.constant 0 : i32
    %c0_i32_0 = arith.constant 0 : i32
    return %arg0, %arg1, %c0_i32 : i32, i32, i32
  }
  func.func @transform_2(%arg0: i32, %arg1: i32) -> (i32, i32, i32, i32) {
    %c0_i32 = arith.constant 0 : i32
    %c0_i32_0 = arith.constant 0 : i32
    %c0_i32_1 = arith.constant 0 : i32
    return %arg0, %arg1, %c0_i32, %c0_i32_0 : i32, i32, i32, i32
  }
  func.func @transform_3(%arg0: i32, %arg1: i32) -> (i32, i32) {
    %c0_i32 = arith.constant 0 : i32
    %c0_i32_0 = arith.constant 0 : i32
    %c0_i32_1 = arith.constant 0 : i32
    return %c0_i32, %c0_i32_0 : i32, i32
  }
  func.func @transform_4(%arg0: i32, %arg1: i32) -> (i32, i32) {
    %c0_i32 = arith.constant 0 : i32
    %c0_i32_0 = arith.constant 0 : i32
    %c0_i32_1 = arith.constant 0 : i32
    return %c0_i32, %c0_i32_0 : i32, i32
  }
  func.func @transform_5(%arg0: i32, %arg1: i32) -> (i32, i32) {
    %c0_i32 = arith.constant 0 : i32
    %c0_i32_0 = arith.constant 0 : i32
    %c0_i32_1 = arith.constant 0 : i32
    return %c0_i32, %c0_i32_0 : i32, i32
  }
  func.func @transform_6(%arg0: i32, %arg1: i32) -> (i32, i32) {
    %c0_i32 = arith.constant 0 : i32
    %c0_i32_0 = arith.constant 0 : i32
    %c0_i32_1 = arith.constant 0 : i32
    return %c0_i32, %c0_i32_0 : i32, i32
  }
  func.func @transform_7(%arg0: i32, %arg1: i32) -> (i32, i32) {
    %c0_i32 = arith.constant 0 : i32
    %c0_i32_0 = arith.constant 0 : i32
    return %arg1, %c0_i32 : i32, i32
  }
  func.func @transform_8(%arg0: i32, %arg1: i32) -> (i32, i32, i32) {
    %c0_i32 = arith.constant 0 : i32
    %c0_i32_0 = arith.constant 0 : i32
    return %arg0, %arg1, %c0_i32 : i32, i32, i32
  }
}

</mosaic_0001>

<llo_original>
// kernel: audio_encoder_trt_forward.1
$region0: #{audio_encoder_trt_forward.1}
  #allocation0 [shape = 'u32[]', space=smem, size = 0x4, offset = 0x4, fixed_abs, tag = 'smem constant byte address 0x4 - core index']
  #allocation1 [shape = 'u32[144,128]{1,0:T(1,128)}', space=vmem, size = 0x12000, scoped, tag = 'internal scratch']
  #allocation2 [shape = 'bf16[8,384]{1,0:T(8,128)(2,1)}', space=vmem, size = 0x1800, scoped, tag = 'scratch operand']
  %s0 = inlined_call_operand.vmem [shape: bf16[2,24,48], index: 0, kind: input, shape index: {}]
  %s1 = inlined_call_operand.vmem [shape: bf16[2,24,48], index: 1, kind: input, shape index: {}]
  %s2 = inlined_call_operand.vmem [shape: bf16[2,3,1,48], index: 2, kind: input, shape index: {}]
  %s3 = inlined_call_operand.vmem [shape: bf16[48,128], index: 3, kind: input, shape index: {}]
  %s4 = inlined_call_operand.vmem [shape: bf16[384,128], index: 4, kind: input, shape index: {}]
  %s5 = inlined_call_operand.vmem [shape: f32[1,128], index: 5, kind: input, shape index: {}]
  %s6 = inlined_call_operand.vmem [shape: f32[1,128], index: 6, kind: input, shape index: {}]
  %s7 = inlined_call_operand.vmem [shape: bf16[24,128], index: 7, kind: input, shape index: {}]
  %s8 = inlined_call_operand.vmem [shape: f32[2,24,128], index: 8, kind: output, shape index: {}]
  %s9 = sld [smem:[#allocation0]]
  $region69: #{audio_encoder_trt_forward.1} parent=0
    _
  %s11 = ssub.s32 1, %s9
  %s12 = scalar_select 0, %s11, %s9
  loop: start=0, step=1, limit=8
  $region2: #{audio_encoder_trt_forward.1} parent=0 // loop_pre_header
    _
  $region3: #{audio_encoder_trt_forward.1} parent=0 // loop_header
    %s14 = sphi 0, %s18
    %p15 = scmp.ge.s32.totalorder %s14, 8
    %s21 = sphi 0, %s33
    %s22 = sphi 0, %s29
    %s23 = sphi 0, %s21
    %s24 = sphi 0, %s22
    %s25 = sphi 0, %s23
    %s26 = sphi 0, %s24
    %s38 = sphi 0, %s40
    %s41 = sphi 0, %s38
    %s42 = sphi 0, %s41
    %s58 = sphi 0, %s42
    %s66 = sphi 0, %s68
    %s69 = sphi 0, %s66
    %s70 = sphi 0, %s69
    %s86 = sphi 0, %s70
    %s94 = sphi 0, %s96
    %s97 = sphi 0, %s94
    %s98 = sphi 0, %s97
    %s114 = sphi 0, %s98
    %s118 = sphi 0, %s118
    %s120 = sphi 0, %s118
    %s121 = sphi 0, %s120
    %s135 = sphi 0, %s121
    %s139 = sphi 0, %s139
    %s141 = sphi 0, %s139
    %s142 = sphi 0, %s141
    %s156 = sphi 0, %s142
    %s160 = sphi 0, %s160
    %s162 = sphi 0, %s160
    %s163 = sphi 0, %s162
    %s177 = sphi 0, %s163
    %s181 = sphi 0, %s181
    %s183 = sphi 0, %s181
    %s184 = sphi 0, %s183
    %s198 = sphi 0, %s184
    %s204 = sphi 0, %s206
    %s207 = sphi 0, %s204
    %s208 = sphi 0, %s207
    %s224 = sphi 0, %s208
    %s232 = sphi 0, %s234
    %s235 = sphi 0, %s232
    %s236 = sphi 0, %s235
    %s252 = sphi 0, %s236
  $region4: #{audio_encoder_trt_forward.1} parent=0 // loop_header_branch
    %17 = sbr.rel (%p15) target = $region8
  $region5: #{audio_encoder_trt_forward.1} parent=0 // loop_body
    %s19 = ssub.s32 %s14, 1
    %s20 = ssub.s32 %s14, 2
    %s27 = sadd.s32 1, %s22
    %p28 = scmp.ge.s32.totalorder %s27, 3
    %s29 = scalar_select %p28, 0, %s27
    %s30 = sadd.s32 1, %s21
    %s31 = scalar_select %p28, %s30, %s21
    %p32 = scmp.ge.s32.totalorder %s31, 2
    %s33 = scalar_select %p32, 0, %s31
    %s34 = ssub.s32 %s21, %s33
    %s35 = ssub.s32 %s22, %s29
    %s36 = sor.u32 %s34, %s35
    %p37 = scmp.eq.s32.totalorder %s36, 0
    %s39 = sadd.s32 %s38, 1
    %s40 = scalar_select %p37, %s38, %s39
    %p43 = pneg %p37
    %p44 = scmp.eq.s32.totalorder %s14, 5
    %p45 = por %p43, %p44
    %p46 = scmp.ne.s32.totalorder %s38, %s41
    %p47 = scmp.eq.s32.totalorder %s14, 0
    %p48 = por %p46, %p47
    %p49 = scmp.ne.s32.totalorder %s38, %s41
    %p50 = scmp.eq.s32.totalorder %s19, 5
    %p51 = por %p49, %p50
    %p52 = scmp.ne.s32.totalorder %s41, %s42
    %p53 = scmp.eq.s32.totalorder %s19, 0
    %p54 = por %p52, %p53
    %p55 = scmp.ne.s32.totalorder %s41, %s42
    %p56 = scmp.eq.s32.totalorder %s20, 5
    %p57 = por %p55, %p56
    %p59 = scmp.ne.s32.totalorder %s42, %s58
    %p60 = scmp.eq.s32.totalorder %s20, 0
    %p61 = por %p59, %p60
    %s62 = ssub.s32 %s21, %s33
    %s63 = ssub.s32 %s22, %s29
    %s64 = sor.u32 %s62, %s63
    %p65 = scmp.eq.s32.totalorder %s64, 0
    %s67 = sadd.s32 %s66, 1
    %s68 = scalar_select %p65, %s66, %s67
    %p71 = pneg %p65
    %p72 = scmp.eq.s32.totalorder %s14, 5
    %p73 = por %p71, %p72
    %p74 = scmp.ne.s32.totalorder %s66, %s69
    %p75 = scmp.eq.s32.totalorder %s14, 0
    %p76 = por %p74, %p75
    %p77 = scmp.ne.s32.totalorder %s66, %s69
    %p78 = scmp.eq.s32.totalorder %s19, 5
    %p79 = por %p77, %p78
    %p80 = scmp.ne.s32.totalorder %s69, %s70
    %p81 = scmp.eq.s32.totalorder %s19, 0
    %p82 = por %p80, %p81
    %p83 = scmp.ne.s32.totalorder %s69, %s70
    %p84 = scmp.eq.s32.totalorder %s20, 5
    %p85 = por %p83, %p84
    %p87 = scmp.ne.s32.totalorder %s70, %s86
    %p88 = scmp.eq.s32.totalorder %s20, 0
    %p89 = por %p87, %p88
    %s90 = ssub.s32 %s21, %s33
    %s91 = ssub.s32 %s22, %s29
    %s92 = sor.u32 %s90, %s91
    %p93 = scmp.eq.s32.totalorder %s92, 0
    %s95 = sadd.s32 %s94, 1
    %s96 = scalar_select %p93, %s94, %s95
    %p99 = pneg %p93
    %p100 = scmp.eq.s32.totalorder %s14, 5
    %p101 = por %p99, %p100
    %p102 = scmp.ne.s32.totalorder %s94, %s97
    %p103 = scmp.eq.s32.totalorder %s14, 0
    %p104 = por %p102, %p103
    %p105 = scmp.ne.s32.totalorder %s94, %s97
    %p106 = scmp.eq.s32.totalorder %s19, 5
    %p107 = por %p105, %p106
    %p108 = scmp.ne.s32.totalorder %s97, %s98
    %p109 = scmp.eq.s32.totalorder %s19, 0
    %p110 = por %p108, %p109
    %p111 = scmp.ne.s32.totalorder %s97, %s98
    %p112 = scmp.eq.s32.totalorder %s20, 5
    %p113 = por %p111, %p112
    %p115 = scmp.ne.s32.totalorder %s98, %s114
    %p116 = scmp.eq.s32.totalorder %s20, 0
    %p117 = por %p115, %p116
    %s119 = sadd.s32 %s118, 1
    %p122 = scmp.eq.s32.totalorder %s14, 5
    %p123 = scmp.ne.s32.totalorder %s118, %s120
    %p124 = scmp.eq.s32.totalorder %s14, 0
    %p125 = por %p123, %p124
    %p126 = scmp.ne.s32.totalorder %s118, %s120
    %p127 = scmp.eq.s32.totalorder %s19, 5
    %p128 = por %p126, %p127
    %p129 = scmp.ne.s32.totalorder %s120, %s121
    %p130 = scmp.eq.s32.totalorder %s19, 0
    %p131 = por %p129, %p130
    %p132 = scmp.ne.s32.totalorder %s120, %s121
    %p133 = scmp.eq.s32.totalorder %s20, 5
    %p134 = por %p132, %p133
    %p136 = scmp.ne.s32.totalorder %s121, %s135
    %p137 = scmp.eq.s32.totalorder %s20, 0
    %p138 = por %p136, %p137
    %s140 = sadd.s32 %s139, 1
    %p143 = scmp.eq.s32.totalorder %s14, 5
    %p144 = scmp.ne.s32.totalorder %s139, %s141
    %p145 = scmp.eq.s32.totalorder %s14, 0
    %p146 = por %p144, %p145
    %p147 = scmp.ne.s32.totalorder %s139, %s141
    %p148 = scmp.eq.s32.totalorder %s19, 5
    %p149 = por %p147, %p148
    %p150 = scmp.ne.s32.totalorder %s141, %s142
    %p151 = scmp.eq.s32.totalorder %s19, 0
    %p152 = por %p150, %p151
    %p153 = scmp.ne.s32.totalorder %s141, %s142
    %p154 = scmp.eq.s32.totalorder %s20, 5
    %p155 = por %p153, %p154
    %p157 = scmp.ne.s32.totalorder %s142, %s156
    %p158 = scmp.eq.s32.totalorder %s20, 0
    %p159 = por %p157, %p158
    %s161 = sadd.s32 %s160, 1
    %p164 = scmp.eq.s32.totalorder %s14, 5
    %p165 = scmp.ne.s32.totalorder %s160, %s162
    %p166 = scmp.eq.s32.totalorder %s14, 0
    %p167 = por %p165, %p166
    %p168 = scmp.ne.s32.totalorder %s160, %s162
    %p169 = scmp.eq.s32.totalorder %s19, 5
    %p170 = por %p168, %p169
    %p171 = scmp.ne.s32.totalorder %s162, %s163
    %p172 = scmp.eq.s32.totalorder %s19, 0
    %p173 = por %p171, %p172
    %p174 = scmp.ne.s32.totalorder %s162, %s163
    %p175 = scmp.eq.s32.totalorder %s20, 5
    %p176 = por %p174, %p175
    %p178 = scmp.ne.s32.totalorder %s163, %s177
    %p179 = scmp.eq.s32.totalorder %s20, 0
    %p180 = por %p178, %p179
    %s182 = sadd.s32 %s181, 1
    %p185 = scmp.eq.s32.totalorder %s14, 5
    %p186 = scmp.ne.s32.totalorder %s181, %s183
    %p187 = scmp.eq.s32.totalorder %s14, 0
    %p188 = por %p186, %p187
    %p189 = scmp.ne.s32.totalorder %s181, %s183
    %p190 = scmp.eq.s32.totalorder %s19, 5
    %p191 = por %p189, %p190
    %p192 = scmp.ne.s32.totalorder %s183, %s184
    %p193 = scmp.eq.s32.totalorder %s19, 0
    %p194 = por %p192, %p193
    %p195 = scmp.ne.s32.totalorder %s183, %s184
    %p196 = scmp.eq.s32.totalorder %s20, 5
    %p197 = por %p195, %p196
    %p199 = scmp.ne.s32.totalorder %s184, %s198
    %p200 = scmp.eq.s32.totalorder %s20, 0
    %p201 = por %p199, %p200
    %s202 = ssub.s32 %s22, %s29
    %p203 = scmp.eq.s32.totalorder %s202, 0
    %s205 = sadd.s32 %s204, 1
    %s206 = scalar_select %p203, %s204, %s205
    %p209 = pneg %p203
    %p210 = scmp.eq.s32.totalorder %s14, 5
    %p211 = por %p209, %p210
    %p212 = scmp.ne.s32.totalorder %s204, %s207
    %p213 = scmp.eq.s32.totalorder %s14, 0
    %p214 = por %p212, %p213
    %p215 = scmp.ne.s32.totalorder %s204, %s207
    %p216 = scmp.eq.s32.totalorder %s19, 5
    %p217 = por %p215, %p216
    %p218 = scmp.ne.s32.totalorder %s207, %s208
    %p219 = scmp.eq.s32.totalorder %s19, 0
    %p220 = por %p218, %p219
    %p221 = scmp.ne.s32.totalorder %s207, %s208
    %p222 = scmp.eq.s32.totalorder %s20, 5
    %p223 = por %p221, %p222
    %p225 = scmp.ne.s32.totalorder %s208, %s224
    %p226 = scmp.eq.s32.totalorder %s20, 0
    %p227 = por %p225, %p226
    %s228 = ssub.s32 %s21, %s33
    %s229 = ssub.s32 %s22, %s29
    %s230 = sor.u32 %s228, %s229
    %p231 = scmp.eq.s32.totalorder %s230, 0
    %s233 = sadd.s32 %s232, 1
    %s234 = scalar_select %p231, %s232, %s233
    %p237 = pneg %p231
    %p238 = scmp.eq.s32.totalorder %s14, 5
    %p239 = por %p237, %p238
    %p240 = scmp.ne.s32.totalorder %s232, %s235
    %p241 = scmp.eq.s32.totalorder %s14, 0
    %p242 = por %p240, %p241
    %p243 = scmp.ne.s32.totalorder %s232, %s235
    %p244 = scmp.eq.s32.totalorder %s19, 5
    %p245 = por %p243, %p244
    %p246 = scmp.ne.s32.totalorder %s235, %s236
    %p247 = scmp.eq.s32.totalorder %s19, 0
    %p248 = por %p246, %p247
    %p249 = scmp.ne.s32.totalorder %s235, %s236
    %p250 = scmp.eq.s32.totalorder %s20, 5
    %p251 = por %p249, %p250
    %p253 = scmp.ne.s32.totalorder %s236, %s252
    %p254 = scmp.eq.s32.totalorder %s20, 0
    %p255 = por %p253, %p254
    %p256 = scmp.le.s32.totalorder 1, %s14
    %p257 = scmp.lt.s32.totalorder %s14, 7
    %p258 = pnand %p256, %p257
    %p259 = pneg %p258
    // Predicated region
    $region9: #{audio_encoder_trt_forward.1} parent=5 // pred_check
      _
    $region10: #{audio_encoder_trt_forward.1} parent=5 // pred_check_branch
      %261 = sbr.rel (%p258) target = $region12
    $region11: #{audio_encoder_trt_forward.1} parent=5 // pred_region
      %s262 = ssub.s32 %s14, 1
      // Predicated region
      $region13: #{audio_encoder_trt_forward.1} parent=11 // pred_check
        %p263 = pneg %p131
      $region14: #{audio_encoder_trt_forward.1} parent=11 // pred_check_branch
        %265 = sbr.rel (%p263) target = $region16
      $region15: #{audio_encoder_trt_forward.1} parent=11 // pred_region
        _
      $region16: #{audio_encoder_trt_forward.1} parent=11 // pred_fallthru
        _
      // Predicated region
      $region17: #{audio_encoder_trt_forward.1} parent=11 // pred_check
        %p266 = pneg %p152
      $region18: #{audio_encoder_trt_forward.1} parent=11 // pred_check_branch
        %268 = sbr.rel (%p266) target = $region20
      $region19: #{audio_encoder_trt_forward.1} parent=11 // pred_region
        _
      $region20: #{audio_encoder_trt_forward.1} parent=11 // pred_fallthru
        _
      // Predicated region
      $region21: #{audio_encoder_trt_forward.1} parent=11 // pred_check
        %p269 = pneg %p173
      $region22: #{audio_encoder_trt_forward.1} parent=11 // pred_check_branch
        %271 = sbr.rel (%p269) target = $region24
      $region23: #{audio_encoder_trt_forward.1} parent=11 // pred_region
        _
      $region24: #{audio_encoder_trt_forward.1} parent=11 // pred_fallthru
        _
      // Predicated region
      $region25: #{audio_encoder_trt_forward.1} parent=11 // pred_check
        %p272 = pneg %p194
      $region26: #{audio_encoder_trt_forward.1} parent=11 // pred_check_branch
        %274 = sbr.rel (%p272) target = $region28
      $region27: #{audio_encoder_trt_forward.1} parent=11 // pred_region
        _
      $region28: #{audio_encoder_trt_forward.1} parent=11 // pred_fallthru
        _
    $region12: #{audio_encoder_trt_forward.1} parent=5 // pred_fallthru
      _
    %p275 = scmp.lt.s32.totalorder %s14, 6
    // Predicated region
    $region29: #{audio_encoder_trt_forward.1} parent=5 // pred_check
      %p276 = pneg %p275
    $region30: #{audio_encoder_trt_forward.1} parent=5 // pred_check_branch
      %278 = sbr.rel (%p276) target = $region32
    $region31: #{audio_encoder_trt_forward.1} parent=5 // pred_region
      // Predicated region
      $region33: #{audio_encoder_trt_forward.1} parent=31 // pred_check
        %p279 = pneg %p48
      $region34: #{audio_encoder_trt_forward.1} parent=31 // pred_check_branch
        %281 = sbr.rel (%p279) target = $region36
      $region35: #{audio_encoder_trt_forward.1} parent=31 // pred_region
        %p282 = scmp.lt.s32.totalorder %s21, 1
        %s283 = scalar_select %p282, %s21, 1
        %p284 = scmp.lt.s32.totalorder %s22, 2
        %s285 = scalar_select %p284, %s22, 2
        %s286 = smul.addr %s283, 3
        %s287 = sadd.s32 %s285, %s286
        %s288 = smul.addr %s287, 4
        %s289 = scalar_lea.vmem %s0, %s288
      $region36: #{audio_encoder_trt_forward.1} parent=31 // pred_fallthru
        _
      // Predicated region
      $region37: #{audio_encoder_trt_forward.1} parent=31 // pred_check
        %p290 = pneg %p76
      $region38: #{audio_encoder_trt_forward.1} parent=31 // pred_check_branch
        %292 = sbr.rel (%p290) target = $region40
      $region39: #{audio_encoder_trt_forward.1} parent=31 // pred_region
        %p293 = scmp.lt.s32.totalorder %s21, 1
        %s294 = scalar_select %p293, %s21, 1
        %p295 = scmp.lt.s32.totalorder %s22, 2
        %s296 = scalar_select %p295, %s22, 2
        %s297 = smul.addr %s294, 3
        %s298 = sadd.s32 %s296, %s297
        %s299 = smul.addr %s298, 4
        %s300 = scalar_lea.vmem %s1, %s299
      $region40: #{audio_encoder_trt_forward.1} parent=31 // pred_fallthru
        _
      // Predicated region
      $region41: #{audio_encoder_trt_forward.1} parent=31 // pred_check
        %p301 = pneg %p104
      $region42: #{audio_encoder_trt_forward.1} parent=31 // pred_check_branch
        %303 = sbr.rel (%p301) target = $region44
      $region43: #{audio_encoder_trt_forward.1} parent=31 // pred_region
        %p304 = scmp.lt.s32.totalorder %s21, 1
        %s305 = scalar_select %p304, %s21, 1
        %p306 = scmp.lt.s32.totalorder %s22, 2
        %s307 = scalar_select %p306, %s22, 2
        %s308 = smul.addr %s305, 3
        %s309 = sadd.s32 %s307, %s308
        %s310 = scalar_lea.vmem %s2, %s309
      $region44: #{audio_encoder_trt_forward.1} parent=31 // pred_fallthru
        _
      // Predicated region
      $region45: #{audio_encoder_trt_forward.1} parent=31 // pred_check
        %p311 = pneg %p214
      $region46: #{audio_encoder_trt_forward.1} parent=31 // pred_check_branch
        %313 = sbr.rel (%p311) target = $region48
      $region47: #{audio_encoder_trt_forward.1} parent=31 // pred_region
        %p314 = scmp.lt.s32.totalorder %s22, 2
        %s315 = scalar_select %p314, %s22, 2
        %s316 = smul.addr %s315, 4
        %s317 = scalar_lea.vmem %s7, %s316
      $region48: #{audio_encoder_trt_forward.1} parent=31 // pred_fallthru
        _
    $region32: #{audio_encoder_trt_forward.1} parent=5 // pred_fallthru
      _
    %p318 = scmp.le.s32.totalorder 1, %s14
    %p319 = scmp.lt.s32.totalorder %s14, 7
    %p320 = pnand %p318, %p319
    %p321 = pneg %p320
    // Predicated region
    $region49: #{audio_encoder_trt_forward.1} parent=5 // pred_check
      _
    $region50: #{audio_encoder_trt_forward.1} parent=5 // pred_check_branch
      %323 = sbr.rel (%p320) target = $region52
    $region51: #{audio_encoder_trt_forward.1} parent=5 // pred_region
      %s324 = ssub.s32 %s14, 1
      %p325 = scmp.lt.s32.totalorder %s23, 1
      %s326 = scalar_select %p325, %s23, 1
      %p327 = scmp.lt.s32.totalorder %s24, 2
      %s328 = scalar_select %p327, %s24, 2
      %s329 = smul.addr %s326, 3
      %s330 = sadd.s32 %s328, %s329
      %s331 = smul.addr %s330, 4
      %s332 = scalar_lea.vmem %s0, %s331
      %p333 = pneg %p54
      %p334 = pneg %p51
      %p335 = scmp.lt.s32.totalorder %s23, 1
      %s336 = scalar_select %p335, %s23, 1
      %p337 = scmp.lt.s32.totalorder %s24, 2
      %s338 = scalar_select %p337, %s24, 2
      %s339 = smul.addr %s336, 3
      %s340 = sadd.s32 %s338, %s339
      %s341 = smul.addr %s340, 4
      %s342 = scalar_lea.vmem %s1, %s341
      %p343 = pneg %p82
      %p344 = pneg %p79
      %p345 = scmp.lt.s32.totalorder %s23, 1
      %s346 = scalar_select %p345, %s23, 1
      %p347 = scmp.lt.s32.totalorder %s24, 2
      %s348 = scalar_select %p347, %s24, 2
      %s349 = smul.addr %s346, 3
      %s350 = sadd.s32 %s348, %s349
      %s351 = scalar_lea.vmem %s2, %s350
      %p352 = pneg %p110
      %p353 = pneg %p107
      %p354 = pneg %p131
      %p355 = pneg %p128
      %p356 = pneg %p152
      %p357 = pneg %p149
      %p358 = pneg %p173
      %p359 = pneg %p170
      %p360 = pneg %p194
      %p361 = pneg %p191
      %p362 = scmp.lt.s32.totalorder %s24, 2
      %s363 = scalar_select %p362, %s24, 2
      %s364 = smul.addr %s363, 4
      %s365 = scalar_lea.vmem %s7, %s364
      %p366 = pneg %p220
      %p367 = pneg %p217
      %p368 = pneg %p248
      %p369 = pneg %p245
      %p370 = scmp.lt.s32.totalorder %s23, 1
      %s371 = scalar_select %p370, %s23, 1
      %p372 = scmp.lt.s32.totalorder %s24, 2
      %s373 = scalar_select %p372, %s24, 2
      %s374 = smul.addr %s371, 3
      %s375 = sadd.s32 %s373, %s374
      %s376 = smul.addr %s375, 8
      %s377 = scalar_lea.vmem %s8, %s376
      %p378 = scmp.lt.s32.totalorder %s23, 1
      %s379 = scalar_select %p378, %s23, 1
      %p380 = scmp.lt.s32.totalorder %s24, 2
      %s381 = scalar_select %p380, %s24, 2
      %s382 = smul.addr %s379, 3
      %s383 = sadd.s32 %s381, %s382
      %s384 = smul.addr %s383, 4
      %s385 = scalar_lea.vmem %s0, %s384
      %p386 = scmp.lt.s32.totalorder %s23, 1
      %s387 = scalar_select %p386, %s23, 1
      %p388 = scmp.lt.s32.totalorder %s24, 2
      %s389 = scalar_select %p388, %s24, 2
      %s390 = smul.addr %s387, 3
      %s391 = sadd.s32 %s389, %s390
      %s392 = smul.addr %s391, 4
      %s393 = scalar_lea.vmem %s1, %s392
      %p394 = scmp.lt.s32.totalorder %s23, 1
      %s395 = scalar_select %p394, %s23, 1
      %p396 = scmp.lt.s32.totalorder %s24, 2
      %s397 = scalar_select %p396, %s24, 2
      %s398 = smul.addr %s395, 3
      %s399 = sadd.s32 %s397, %s398
      %s400 = scalar_lea.vmem %s2, %s399
      %p401 = scmp.lt.s32.totalorder %s24, 2
      %s402 = scalar_select %p401, %s24, 2
      %s403 = smul.addr %s402, 4
      %s404 = scalar_lea.vmem %s7, %s403
      %p405 = scmp.lt.s32.totalorder %s23, 1
      %s406 = scalar_select %p405, %s23, 1
      %p407 = scmp.lt.s32.totalorder %s24, 2
      %s408 = scalar_select %p407, %s24, 2
      %s409 = smul.addr %s406, 3
      %s410 = sadd.s32 %s408, %s409
      %s411 = smul.addr %s410, 8
      %s412 = scalar_lea.vmem %s8, %s411
      %v414 = vld [vmem:[%s385] sm:$0xf]
      %v415 = vld [vmem:[%s3] sm:$0xf]
      %v416 = vld [vmem:[%s3 + $0x4] sm:$0xf]
      %v417 = vld [vmem:[%s3 + $0x8] sm:$0xf]
      %v418 = vld [vmem:[%s3 + $0xc] sm:$0xf]
      %v419 = vld [vmem:[%s3 + $0x10] sm:$0xf]
      %v420 = vld [vmem:[%s3 + $0x14] sm:$0xf]
      %v421 = vld [vmem:[%s5] sm:$0x1]
      %v423 = vlaneseq
      %v424 = vshrl.u32 %v423, 7
      %v425 = vsub.s32 0, %v424
      %v426 = vrot.slane %v421, %v425
      %v434 = vunpack.c.l.b16 %v415
      %v435 = vunpack.c.l.b16 %v416
      %v436 = vunpack.c.l.b16 %v417
      %v437 = vunpack.c.l.b16 %v418
      %v438 = vunpack.c.l.b16 %v419
      %v439 = vunpack.c.l.b16 %v420
      %v440 = vpack.c.b16 %v435, %v434
      %v441 = vpack.c.b16 %v437, %v436
      %v442 = vpack.c.b16 %v439, %v438
      %vm446 = vcmask 392192
      %v448 = vsel %vm446, %v414, 0
      %450 = vmatprep.subr.bf16.mxu0 0
      %451 = vmatpush1.bf16.msra.mxu0 0
      %452 = vmatprep.subr.bf16.mxu0 0
      %453 = vmatpush1.bf16.msra.mxu0 0
      %454 = vmatprep.subr.bf16.mxu0 0
      %455 = vmatpush1.bf16.msra.mxu0 0
      %456 = vmatprep.subr.bf16.mxu0 0
      %457 = vmatpush1.bf16.msra.mxu0 0
      %458 = vmatprep.subr.bf16.mxu0 0
      %459 = vmatpush1.bf16.msra.mxu0 0
      %460 = vmatprep.subr.bf16.mxu0 0
      %461 = vmatpush1.bf16.msra.mxu0 %v442
      %462 = vmatprep.subr.bf16.mxu0 0
      %463 = vmatpush1.bf16.msra.mxu0 %v441
      %464 = vmatprep.subr.bf16.mxu0 0
      %465 = vmatpush1.bf16.msra.mxu0 %v440
      %466 = vmatprep.subr.bf16.mxu0 0
      %467 = vmatpush2.bf16.msra.mxu0 0
      %468 = vmatprep.subr.bf16.mxu0 0
      %469 = vmatpush2.bf16.msra.mxu0 0
      %470 = vmatprep.subr.bf16.mxu0 0
      %471 = vmatpush2.bf16.msra.mxu0 0
      %472 = vmatprep.subr.bf16.mxu0 0
      %473 = vmatpush2.bf16.msra.mxu0 0
      %474 = vmatprep.subr.bf16.mxu0 0
      %475 = vmatpush2.bf16.msra.mxu0 0
      %476 = vmatprep.subr.bf16.mxu0 0
      %477 = vmatpush2.bf16.msra.mxu0 0
      %478 = vmatprep.subr.bf16.mxu0 0
      %479 = vmatpush2.bf16.msra.mxu0 0
      %480 = vmatprep.subr.bf16.mxu0 0
      %481 = vmatpush2.bf16.msra.mxu0 0
      %482 = vmatprep.mubr.bf16.mxu0 0
      %483 = vmatmul.mubr.bf16.gmra.mxu0 %v448
      %v484 = vpop.f32.mrf.mxu0
      %v485 = vadd.f32 %v426, %v484
      %v486 = vpop.f32.mrf.mxu0
      %v487 = vpop.f32.mrf.mxu0
      %v488 = vpop.f32.mrf.mxu0
      %489 = vdwg.mxu0
      %v490 = vmul.f32 %v485, %v485
      %v491 = vmul.f32 %v485, %v490
      %v492 = vmul.f32 %v491, 0.044715
      %v493 = vadd.f32 %v485, %v492
      %v494 = vmul.f32 %v493, 0.7978846
      %v495 = vtanh.pop %v494
      %v496 = vadd.f32 %v495, 1.0
      %v497 = vmul.f32 %v496, 0.5
      %v498 = vmul.f32 %v485, %v497
      %v499 = vpack.c.bf16 %v498, %v498
      %500 = vst [vmem:[#allocation2] sm:$0xf] %v499
      %v501 = vld [vmem:[%s393] sm:$0xf]
      %v502 = vld [vmem:[%s3] sm:$0xf]
      %v503 = vld [vmem:[%s3 + $0x4] sm:$0xf]
      %v504 = vld [vmem:[%s3 + $0x8] sm:$0xf]
      %v505 = vld [vmem:[%s3 + $0xc] sm:$0xf]
      %v506 = vld [vmem:[%s3 + $0x10] sm:$0xf]
      %v507 = vld [vmem:[%s3 + $0x14] sm:$0xf]
      %v508 = vld [vmem:[%s5] sm:$0x1]
      %v510 = vlaneseq
      %v511 = vshrl.u32 %v510, 7
      %v512 = vsub.s32 0, %v511
      %v513 = vrot.slane %v508, %v512
      %v521 = vunpack.c.l.b16 %v502
      %v522 = vunpack.c.l.b16 %v503
      %v523 = vunpack.c.l.b16 %v504
      %v524 = vunpack.c.l.b16 %v505
      %v525 = vunpack.c.l.b16 %v506
      %v526 = vunpack.c.l.b16 %v507
      %v527 = vpack.c.b16 %v522, %v521
      %v528 = vpack.c.b16 %v524, %v523
      %v529 = vpack.c.b16 %v526, %v525
      %v534 = vsel %vm446, %v501, 0
      %536 = vmatprep.subr.bf16.mxu0 0
      %537 = vmatpush1.bf16.msra.mxu0 0
      %538 = vmatprep.subr.bf16.mxu0 0
      %539 = vmatpush1.bf16.msra.mxu0 0
      %540 = vmatprep.subr.bf16.mxu0 0
      %541 = vmatpush1.bf16.msra.mxu0 0
      %542 = vmatprep.subr.bf16.mxu0 0
      %543 = vmatpush1.bf16.msra.mxu0 0
      %544 = vmatprep.subr.bf16.mxu0 0
      %545 = vmatpush1.bf16.msra.mxu0 0
      %546 = vmatprep.subr.bf16.mxu0 0
      %547 = vmatpush1.bf16.msra.mxu0 %v529
      %548 = vmatprep.subr.bf16.mxu0 0
      %549 = vmatpush1.bf16.msra.mxu0 %v528
      %550 = vmatprep.subr.bf16.mxu0 0
      %551 = vmatpush1.bf16.msra.mxu0 %v527
      %552 = vmatprep.subr.bf16.mxu0 0
      %553 = vmatpush2.bf16.msra.mxu0 0
      %554 = vmatprep.subr.bf16.mxu0 0
      %555 = vmatpush2.bf16.msra.mxu0 0
      %556 = vmatprep.subr.bf16.mxu0 0
      %557 = vmatpush2.bf16.msra.mxu0 0
      %558 = vmatprep.subr.bf16.mxu0 0
      %559 = vmatpush2.bf16.msra.mxu0 0
      %560 = vmatprep.subr.bf16.mxu0 0
      %561 = vmatpush2.bf16.msra.mxu0 0
      %562 = vmatprep.subr.bf16.mxu0 0
      %563 = vmatpush2.bf16.msra.mxu0 0
      %564 = vmatprep.subr.bf16.mxu0 0
      %565 = vmatpush2.bf16.msra.mxu0 0
      %566 = vmatprep.subr.bf16.mxu0 0
      %567 = vmatpush2.bf16.msra.mxu0 0
      %568 = vmatprep.mubr.bf16.mxu0 0
      %569 = vmatmul.mubr.bf16.gmra.mxu0 %v534
      %v570 = vpop.f32.mrf.mxu0
      %v571 = vadd.f32 %v513, %v570
      %v572 = vpop.f32.mrf.mxu0
      %v573 = vpop.f32.mrf.mxu0
      %v574 = vpop.f32.mrf.mxu0
      %575 = vdwg.mxu0
      %v576 = vmul.f32 %v571, %v571
      %v577 = vmul.f32 %v571, %v576
      %v578 = vmul.f32 %v577, 0.044715
      %v579 = vadd.f32 %v571, %v578
      %v580 = vmul.f32 %v579, 0.7978846
      %v581 = vtanh.pop %v580
      %v582 = vadd.f32 %v581, 1.0
      %v583 = vmul.f32 %v582, 0.5
      %v584 = vmul.f32 %v571, %v583
      %v585 = vld [vmem:[%s400] sm:$0x1]
      %v587 = vsel %vm446, %v585, 0
      %589 = vmatprep.subr.bf16.mxu0 0
      %590 = vmatpush1.bf16.msra.mxu0 0
      %591 = vmatprep.subr.bf16.mxu0 0
      %592 = vmatpush1.bf16.msra.mxu0 0
      %593 = vmatprep.subr.bf16.mxu0 0
      %594 = vmatpush1.bf16.msra.mxu0 0
      %595 = vmatprep.subr.bf16.mxu0 0
      %596 = vmatpush1.bf16.msra.mxu0 0
      %597 = vmatprep.subr.bf16.mxu0 0
      %598 = vmatpush1.bf16.msra.mxu0 0
      %599 = vmatprep.subr.bf16.mxu0 0
      %600 = vmatpush1.bf16.msra.mxu0 %v529
      %601 = vmatprep.subr.bf16.mxu0 0
      %602 = vmatpush1.bf16.msra.mxu0 %v528
      %603 = vmatprep.subr.bf16.mxu0 0
      %604 = vmatpush1.bf16.msra.mxu0 %v527
      %605 = vmatprep.subr.bf16.mxu0 0
      %606 = vmatpush2.bf16.msra.mxu0 0
      %607 = vmatprep.subr.bf16.mxu0 0
      %608 = vmatpush2.bf16.msra.mxu0 0
      %609 = vmatprep.subr.bf16.mxu0 0
      %610 = vmatpush2.bf16.msra.mxu0 0
      %611 = vmatprep.subr.bf16.mxu0 0
      %612 = vmatpush2.bf16.msra.mxu0 0
      %613 = vmatprep.subr.bf16.mxu0 0
      %614 = vmatpush2.bf16.msra.mxu0 0
      %615 = vmatprep.subr.bf16.mxu0 0
      %616 = vmatpush2.bf16.msra.mxu0 0
      %617 = vmatprep.subr.bf16.mxu0 0
      %618 = vmatpush2.bf16.msra.mxu0 0
      %619 = vmatprep.subr.bf16.mxu0 0
      %620 = vmatpush2.bf16.msra.mxu0 0
      %621 = vmatprep.mubr.bf16.mxu0 0
      %622 = vmatmul.mubr.bf16.gmra.mxu0 %v587
      %v623 = vpop.f32.mrf.mxu0
      %v624 = vadd.f32 %v508, %v623
      %v625 = vpop.f32.mrf.mxu0
      %v626 = vpop.f32.mrf.mxu0
      %v627 = vpop.f32.mrf.mxu0
      %628 = vdwg.mxu0
      %v629 = vmul.f32 %v624, %v624
      %v630 = vmul.f32 %v624, %v629
      %v631 = vmul.f32 %v630, 0.044715
      %v632 = vadd.f32 %v624, %v631
      %v633 = vmul.f32 %v632, 0.7978846
      %v634 = vtanh.pop %v633
      %v635 = vadd.f32 %v634, 1.0
      %v636 = vmul.f32 %v635, 0.5
      %v637 = vmul.f32 %v624, %v636
      %v638 = vpack.c.bf16 %v584, %v584
      %639 = vst [vmem:[#allocation2 + $0x4] sm:$0xf] %v638
      %v641 = vrot.slane %v584, 1
      %v644 = vrot.slane %v637, 1
      %vm646 = vcmask 1046528
      %v647 = vsel %vm646, %v641, %v644
      %v648 = vpack.c.bf16 %v647, %v647
      %649 = vst [vmem:[#allocation2 + $0x8] sm:$0xf] %v648
      %p650 = scmp.eq.s32.totalorder %s24, 0
      // Predicated region
      $region53: #{audio_encoder_trt_forward.1} parent=51 // pred_check
        %p651 = pneg %p650
      $region54: #{audio_encoder_trt_forward.1} parent=51 // pred_check_branch
        %653 = sbr.rel (%p651) target = $region56
      $region55: #{audio_encoder_trt_forward.1} parent=51 // pred_region
        %vm654 = vcmask 1040384
        %vm655 = vsmask.f32 256
        %vm656 = vmand %vm654, %vm655
        %v657 = vld [vmem:[#allocation2 + $0x4] sm:$0x1]
        %v658 = vsel %vm656, 0, %v657
        %659 = vst [vmem:[#allocation2 + $0x4] sm:$0x1] %v658
      $region56: #{audio_encoder_trt_forward.1} parent=51 // pred_fallthru
        _
      %v660 = vld [vmem:[#allocation2] sm:$0xff]
      %v661 = vld [vmem:[#allocation2 + $0x8] sm:$0xf]
      %v662 = vld [vmem:[%s4] sm:$0xf]
      %v663 = vld [vmem:[%s4 + $0x4] sm:$0xf]
      %v664 = vld [vmem:[%s4 + $0x8] sm:$0xf]
      %v665 = vld [vmem:[%s4 + $0xc] sm:$0xf]
      %v666 = vld [vmem:[%s4 + $0x10] sm:$0xf]
      %v667 = vld [vmem:[%s4 + $0x14] sm:$0xf]
      %v668 = vld [vmem:[%s4 + $0x18] sm:$0xf]
      %v669 = vld [vmem:[%s4 + $0x1c] sm:$0xf]
      %v670 = vld [vmem:[%s4 + $0x20] sm:$0xf]
      %v671 = vld [vmem:[%s4 + $0x24] sm:$0xf]
      %v672 = vld [vmem:[%s4 + $0x28] sm:$0xf]
      %v673 = vld [vmem:[%s4 + $0x2c] sm:$0xf]
      %v674 = vld [vmem:[%s4 + $0x30] sm:$0xf]
      %v675 = vld [vmem:[%s4 + $0x34] sm:$0xf]
      %v676 = vld [vmem:[%s4 + $0x38] sm:$0xf]
      %v677 = vld [vmem:[%s4 + $0x3c] sm:$0xf]
      %v678 = vld [vmem:[%s4 + $0x40] sm:$0xf]
      %v679 = vld [vmem:[%s4 + $0x44] sm:$0xf]
      %v680 = vld [vmem:[%s4 + $0x48] sm:$0xf]
      %v681 = vld [vmem:[%s4 + $0x4c] sm:$0xf]
      %v682 = vld [vmem:[%s4 + $0x50] sm:$0xf]
      %v683 = vld [vmem:[%s4 + $0x54] sm:$0xf]
      %v684 = vld [vmem:[%s4 + $0x58] sm:$0xf]
      %v685 = vld [vmem:[%s4 + $0x5c] sm:$0xf]
      %v686 = vld [vmem:[%s4 + $0x60] sm:$0xf]
      %v687 = vld [vmem:[%s4 + $0x64] sm:$0xf]
      %v688 = vld [vmem:[%s4 + $0x68] sm:$0xf]
      %v689 = vld [vmem:[%s4 + $0x6c] sm:$0xf]
      %v690 = vld [vmem:[%s4 + $0x70] sm:$0xf]
      %v691 = vld [vmem:[%s4 + $0x74] sm:$0xf]
      %v692 = vld [vmem:[%s4 + $0x78] sm:$0xf]
      %v693 = vld [vmem:[%s4 + $0x7c] sm:$0xf]
      %v694 = vld [vmem:[%s4 + $0x80] sm:$0xf]
      %v695 = vld [vmem:[%s4 + $0x84] sm:$0xf]
      %v696 = vld [vmem:[%s4 + $0x88] sm:$0xf]
      %v697 = vld [vmem:[%s4 + $0x8c] sm:$0xf]
      %v698 = vld [vmem:[%s4 + $0x90] sm:$0xf]
      %v699 = vld [vmem:[%s4 + $0x94] sm:$0xf]
      %v700 = vld [vmem:[%s4 + $0x98] sm:$0xf]
      %v701 = vld [vmem:[%s4 + $0x9c] sm:$0xf]
      %v702 = vld [vmem:[%s4 + $0xa0] sm:$0xf]
      %v703 = vld [vmem:[%s4 + $0xa4] sm:$0xf]
      %v704 = vld [vmem:[%s4 + $0xa8] sm:$0xf]
      %v705 = vld [vmem:[%s4 + $0xac] sm:$0xf]
      %v706 = vld [vmem:[%s4 + $0xb0] sm:$0xf]
      %v707 = vld [vmem:[%s4 + $0xb4] sm:$0xf]
      %v708 = vld [vmem:[%s4 + $0xb8] sm:$0xf]
      %v709 = vld [vmem:[%s4 + $0xbc] sm:$0xf]
      %v710 = vld [vmem:[%s6] sm:$0x1]
      %v712 = vlaneseq
      %v713 = vshrl.u32 %v712, 7
      %v714 = vsub.s32 0, %v713
      %v715 = vrot.slane %v710, %v714
      %v719 = vunpack.c.l.b16 %v660
      %v720 = vunpack.c.h.b16 %v660
      %v721 = vunpack.c.l.b16 %v661
      %v722 = vpack.c.b16 %v719, %v719
      %v723 = vpack.c.b16 %v720, %v720
      %v724 = vpack.c.b16 %v721, %v721
      %v776 = vunpack.c.l.b16 %v662
      %v777 = vunpack.c.l.b16 %v663
      %v778 = vunpack.c.l.b16 %v664
      %v779 = vunpack.c.l.b16 %v665
      %v780 = vunpack.c.l.b16 %v666
      %v781 = vunpack.c.l.b16 %v667
      %v782 = vunpack.c.l.b16 %v668
      %v783 = vunpack.c.l.b16 %v669
      %v784 = vunpack.c.l.b16 %v670
      %v785 = vunpack.c.l.b16 %v671
      %v786 = vunpack.c.l.b16 %v672
      %v787 = vunpack.c.l.b16 %v673
      %v788 = vunpack.c.l.b16 %v674
      %v789 = vunpack.c.l.b16 %v675
      %v790 = vunpack.c.l.b16 %v676
      %v791 = vunpack.c.l.b16 %v677
      %v792 = vunpack.c.l.b16 %v678
      %v793 = vunpack.c.l.b16 %v679
      %v794 = vunpack.c.l.b16 %v680
      %v795 = vunpack.c.l.b16 %v681
      %v796 = vunpack.c.l.b16 %v682
      %v797 = vunpack.c.l.b16 %v683
      %v798 = vunpack.c.l.b16 %v684
      %v799 = vunpack.c.l.b16 %v685
      %v800 = vunpack.c.l.b16 %v686
      %v801 = vunpack.c.l.b16 %v687
      %v802 = vunpack.c.l.b16 %v688
      %v803 = vunpack.c.l.b16 %v689
      %v804 = vunpack.c.l.b16 %v690
      %v805 = vunpack.c.l.b16 %v691
      %v806 = vunpack.c.l.b16 %v692
      %v807 = vunpack.c.l.b16 %v693
      %v808 = vunpack.c.l.b16 %v694
      %v809 = vunpack.c.l.b16 %v695
      %v810 = vunpack.c.l.b16 %v696
      %v811 = vunpack.c.l.b16 %v697
      %v812 = vunpack.c.l.b16 %v698
      %v813 = vunpack.c.l.b16 %v699
      %v814 = vunpack.c.l.b16 %v700
      %v815 = vunpack.c.l.b16 %v701
      %v816 = vunpack.c.l.b16 %v702
      %v817 = vunpack.c.l.b16 %v703
      %v818 = vunpack.c.l.b16 %v704
      %v819 = vunpack.c.l.b16 %v705
      %v820 = vunpack.c.l.b16 %v706
      %v821 = vunpack.c.l.b16 %v707
      %v822 = vunpack.c.l.b16 %v708
      %v823 = vunpack.c.l.b16 %v709
      %v824 = vpack.c.b16 %v777, %v776
      %v825 = vpack.c.b16 %v779, %v778
      %v826 = vpack.c.b16 %v781, %v780
      %v827 = vpack.c.b16 %v783, %v782
      %v828 = vpack.c.b16 %v785, %v784
      %v829 = vpack.c.b16 %v787, %v786
      %v830 = vpack.c.b16 %v789, %v788
      %v831 = vpack.c.b16 %v791, %v790
      %v832 = vpack.c.b16 %v793, %v792
      %v833 = vpack.c.b16 %v795, %v794
      %v834 = vpack.c.b16 %v797, %v796
      %v835 = vpack.c.b16 %v799, %v798
      %v836 = vpack.c.b16 %v801, %v800
      %v837 = vpack.c.b16 %v803, %v802
      %v838 = vpack.c.b16 %v805, %v804
      %v839 = vpack.c.b16 %v807, %v806
      %v840 = vpack.c.b16 %v809, %v808
      %v841 = vpack.c.b16 %v811, %v810
      %v842 = vpack.c.b16 %v813, %v812
      %v843 = vpack.c.b16 %v815, %v814
      %v844 = vpack.c.b16 %v817, %v816
      %v845 = vpack.c.b16 %v819, %v818
      %v846 = vpack.c.b16 %v821, %v820
      %v847 = vpack.c.b16 %v823, %v822
      %872 = vmatprep.subr.bf16.mxu0 0
      %873 = vmatpush1.bf16.msra.mxu0 %v831
      %874 = vmatprep.subr.bf16.mxu0 0
      %875 = vmatpush1.bf16.msra.mxu0 %v830
      %876 = vmatprep.subr.bf16.mxu0 0
      %877 = vmatpush1.bf16.msra.mxu0 %v829
      %878 = vmatprep.subr.bf16.mxu0 0
      %879 = vmatpush1.bf16.msra.mxu0 %v828
      %880 = vmatprep.subr.bf16.mxu0 0
      %881 = vmatpush1.bf16.msra.mxu0 %v827
      %882 = vmatprep.subr.bf16.mxu0 0
      %883 = vmatpush1.bf16.msra.mxu0 %v826
      %884 = vmatprep.subr.bf16.mxu0 0
      %885 = vmatpush1.bf16.msra.mxu0 %v825
      %886 = vmatprep.subr.bf16.mxu0 0
      %887 = vmatpush1.bf16.msra.mxu0 %v824
      %888 = vmatprep.subr.bf16.mxu0 0
      %889 = vmatpush2.bf16.msra.mxu0 %v839
      %890 = vmatprep.subr.bf16.mxu0 0
      %891 = vmatpush2.bf16.msra.mxu0 %v838
      %892 = vmatprep.subr.bf16.mxu0 0
      %893 = vmatpush2.bf16.msra.mxu0 %v837
      %894 = vmatprep.subr.bf16.mxu0 0
      %895 = vmatpush2.bf16.msra.mxu0 %v836
      %896 = vmatprep.subr.bf16.mxu0 0
      %897 = vmatpush2.bf16.msra.mxu0 %v835
      %898 = vmatprep.subr.bf16.mxu0 0
      %899 = vmatpush2.bf16.msra.mxu0 %v834
      %900 = vmatprep.subr.bf16.mxu0 0
      %901 = vmatpush2.bf16.msra.mxu0 %v833
      %902 = vmatprep.subr.bf16.mxu0 0
      %903 = vmatpush2.bf16.msra.mxu0 %v832
      %904 = vmatprep.mubr.bf16.mxu0 %v723
      %905 = vmatmul.mubr.bf16.gmra.mxu0 %v722
      %v906 = vpop.f32.mrf.mxu0
      %v907 = vadd.f32 %v715, %v906
      %v908 = vpop.f32.mrf.mxu0
      %v909 = vpop.f32.mrf.mxu0
      %v910 = vpop.f32.mrf.mxu0
      %911 = vdwg.mxu0
      %912 = vmatprep.subr.bf16.mxu0 0
      %913 = vmatpush1.bf16.msra.mxu0 %v847
      %914 = vmatprep.subr.bf16.mxu0 0
      %915 = vmatpush1.bf16.msra.mxu0 %v846
      %916 = vmatprep.subr.bf16.mxu0 0
      %917 = vmatpush1.bf16.msra.mxu0 %v845
      %918 = vmatprep.subr.bf16.mxu0 0
      %919 = vmatpush1.bf16.msra.mxu0 %v844
      %920 = vmatprep.subr.bf16.mxu0 0
      %921 = vmatpush1.bf16.msra.mxu0 %v843
      %922 = vmatprep.subr.bf16.mxu0 0
      %923 = vmatpush1.bf16.msra.mxu0 %v842
      %924 = vmatprep.subr.bf16.mxu0 0
      %925 = vmatpush1.bf16.msra.mxu0 %v841
      %926 = vmatprep.subr.bf16.mxu0 0
      %927 = vmatpush1.bf16.msra.mxu0 %v840
      %928 = vmatprep.subr.bf16.mxu0 0
      %929 = vmatpush2.bf16.msra.mxu0 0
      %930 = vmatprep.subr.bf16.mxu0 0
      %931 = vmatpush2.bf16.msra.mxu0 0
      %932 = vmatprep.subr.bf16.mxu0 0
      %933 = vmatpush2.bf16.msra.mxu0 0
      %934 = vmatprep.subr.bf16.mxu0 0
      %935 = vmatpush2.bf16.msra.mxu0 0
      %936 = vmatprep.subr.bf16.mxu0 0
      %937 = vmatpush2.bf16.msra.mxu0 0
      %938 = vmatprep.subr.bf16.mxu0 0
      %939 = vmatpush2.bf16.msra.mxu0 0
      %940 = vmatprep.subr.bf16.mxu0 0
      %941 = vmatpush2.bf16.msra.mxu0 0
      %942 = vmatprep.subr.bf16.mxu0 0
      %943 = vmatpush2.bf16.msra.mxu0 0
      %944 = vmatprep.mubr.bf16.mxu0 0
      %945 = vmatmul.mubr.bf16.gmra.mxu0 %v724
      %v946 = vpop.f32.mrf.mxu0
      %v947 = vadd.f32 %v907, %v946
      %v948 = vpop.f32.mrf.mxu0
      %v949 = vpop.f32.mrf.mxu0
      %v950 = vpop.f32.mrf.mxu0
      %951 = vdwg.mxu0
      %v952 = vmul.f32 %v947, %v947
      %v953 = vmul.f32 %v947, %v952
      %v954 = vmul.f32 %v953, 0.044715
      %v955 = vadd.f32 %v947, %v954
      %v956 = vmul.f32 %v955, 0.7978846
      %v957 = vtanh.pop %v956
      %v958 = vadd.f32 %v957, 1.0
      %v959 = vmul.f32 %v958, 0.5
      %v960 = vmul.f32 %v947, %v959
      %v961 = vld [vmem:[%s404] sm:$0xf]
      %v962 = vunpack.c.l.bf16 %v961
      %v963 = vadd.f32 %v960, %v962
      %964 = vst [vmem:[%s412] sm:$0xff] %v963
      %p965 = scmp.lt.s32.totalorder %s23, 1
      %s966 = scalar_select %p965, %s23, 1
      %p967 = scmp.lt.s32.totalorder %s24, 2
      %s968 = scalar_select %p967, %s24, 2
      %s969 = smul.addr %s966, 3
      %s970 = sadd.s32 %s968, %s969
      %s971 = smul.addr %s970, 8
      %s972 = scalar_lea.vmem %s8, %s971
      // Predicated region
      $region57: #{audio_encoder_trt_forward.1} parent=51 // pred_check
        %p973 = pneg %p245
      $region58: #{audio_encoder_trt_forward.1} parent=51 // pred_check_branch
        %975 = sbr.rel (%p973) target = $region60
      $region59: #{audio_encoder_trt_forward.1} parent=51 // pred_region
        _
      $region60: #{audio_encoder_trt_forward.1} parent=51 // pred_fallthru
        _
    $region52: #{audio_encoder_trt_forward.1} parent=5 // pred_fallthru
      _
    %p976 = scmp.le.s32.totalorder 2, %s14
    // Predicated region
    $region61: #{audio_encoder_trt_forward.1} parent=5 // pred_check
      %p977 = pneg %p976
    $region62: #{audio_encoder_trt_forward.1} parent=5 // pred_check_branch
      %979 = sbr.rel (%p977) target = $region64
    $region63: #{audio_encoder_trt_forward.1} parent=5 // pred_region
      %s980 = ssub.s32 %s14, 2
      // Predicated region
      $region65: #{audio_encoder_trt_forward.1} parent=63 // pred_check
        %p981 = pneg %p251
      $region66: #{audio_encoder_trt_forward.1} parent=63 // pred_check_branch
        %983 = sbr.rel (%p981) target = $region68
      $region67: #{audio_encoder_trt_forward.1} parent=63 // pred_region
        %p984 = scmp.lt.s32.totalorder %s25, 1
        %s985 = scalar_select %p984, %s25, 1
        %p986 = scmp.lt.s32.totalorder %s26, 2
        %s987 = scalar_select %p986, %s26, 2
        %s988 = smul.addr %s985, 3
        %s989 = sadd.s32 %s987, %s988
        %s990 = smul.addr %s989, 8
        %s991 = scalar_lea.vmem %s8, %s990
      $region68: #{audio_encoder_trt_forward.1} parent=63 // pred_fallthru
        _
    $region64: #{audio_encoder_trt_forward.1} parent=5 // pred_fallthru
      _
  $region6: #{audio_encoder_trt_forward.1} parent=0 // loop_footer
    %s18 = sadd.s32 1, %s14
  $region7: #{audio_encoder_trt_forward.1} parent=0 // loop_footer_branch
    %13 = sbr.rel target = $region3
  $region8: #{audio_encoder_trt_forward.1} parent=0 // loop_exit
    _

</llo_original>
